<compile_context>
chip_gen: v6e
topology: v6e:2x2x1
jax: 0.10.0
libtpu: 0.0.40
codegen_flags: <defaults>
</compile_context>

<pallas_src>
import math
from functools import partial

import jax
import jax.numpy as jnp
from jax.experimental import pallas as pl
from jax.experimental.pallas import tpu as pltpu


# ------------------------------ helpers ----------------------------------- #

def _round_up(x, m):
    return ((x + m - 1) // m) * m


def _pick_tile(dim_padded, cap):
    """Largest multiple of 128 that divides dim_padded and is <= cap (>=128)."""
    t = min(dim_padded, max(128, (cap // 128) * 128))
    t = max(128, (t // 128) * 128)
    while dim_padded % t != 0:
        t -= 128
    return t


def _num_tensorcores():
    """Best-effort per-chip TensorCore count (2 on v7x, 1 on v5e/v6e)."""
    try:
        info = pltpu.get_tpu_info()
        for name in ("num_tensorcores", "tensorcore_count", "num_cores",
                     "cores_per_chip"):
            v = getattr(info, name, None)
            if isinstance(v, int) and v > 0:
                return v
    except Exception:
        pass
    return 1  # conservative default: no megacore split


# ----------------------------- Pallas kernel ------------------------------- #

def _hl_kernel(*refs, has_bias, out_is_f32, cast_lhs):
    """One (tm, tn) output tile, reduced over the K grid axis (axis 2).

    If the output dtype is f32, the output block itself is the accumulator
    (its block index is constant along K, so it stays resident in VMEM and is
    written back to HBM only once).  Bias is folded into the accumulator init
    (no epilogue add).  bf16 operands feed the MXU; accumulation is f32."""
    if out_is_f32:
        if has_bias:
            x_ref, wt_ref, b_ref, o_ref = refs
        else:
            (x_ref, wt_ref, o_ref), b_ref = refs, None
        acc_ref = o_ref
    else:
        if has_bias:
            x_ref, wt_ref, b_ref, o_ref, acc_ref = refs
        else:
            (x_ref, wt_ref, o_ref, acc_ref), b_ref = refs, None

    k = pl.program_id(2)

    @pl.when(k == 0)
    def _():
        if b_ref is not None:
            acc_ref[...] = jnp.broadcast_to(
                b_ref[...].astype(jnp.float32), acc_ref.shape
            )
        else:
            acc_ref[...] = jnp.zeros_like(acc_ref)

    lhs = x_ref[...]
    if cast_lhs:
        lhs = lhs.astype(wt_ref.dtype)  # bf16 operands -> native MXU rate
    acc_ref[...] += jnp.dot(lhs, wt_ref[...],
                            preferred_element_type=jnp.float32)

    if not out_is_f32:
        @pl.when(k == pl.num_programs(2) - 1)
        def _():
            o_ref[...] = acc_ref[...].astype(o_ref.dtype)


def _linear_pallas(x2d, w_t, bias_row, *, tm, tn, tk, out_dtype):
    """x2d: (M, K), w_t: (K, N) (bf16), bias_row: (1, N) f32 or None.
    All dims are exact multiples of their tile sizes (padding by caller)."""
    M, K = x2d.shape
    K2, N = w_t.shape
    assert K == K2 and M % tm == 0 and N % tn == 0 and K % tk == 0
    gm, gn, gk = M // tm, N // tn, K // tk

    # Deeper pipelining on BOTH per-k streams when the K loop is long.
    nbuf = 3 if gk >= 3 else 2
    stream_kwargs = {"pipeline_mode": pl.Buffered(nbuf)} if nbuf != 2 else {}
    x_spec = pl.BlockSpec((tm, tk), lambda i, j, k: (i, k), **stream_kwargs)
    wt_spec = pl.BlockSpec((tk, tn), lambda i, j, k: (k, j), **stream_kwargs)

    in_specs = [x_spec, wt_spec]
    args = [x2d, w_t]
    has_bias = bias_row is not None
    if has_bias:
        in_specs.append(pl.BlockSpec((1, tn), lambda i, j, k: (0, j)))
        args.append(bias_row)

    out_is_f32 = jnp.dtype(out_dtype) == jnp.dtype(jnp.float32)
    scratch_shapes = [] if out_is_f32 else [pltpu.VMEM((tm, tn), jnp.float32)]

    kernel = partial(
        _hl_kernel,
        has_bias=has_bias,
        out_is_f32=out_is_f32,
        cast_lhs=(x2d.dtype != w_t.dtype),
    )

    # Truthful traffic estimate: W^T re-streamed gm times, x re-streamed gn
    # times, output written once.
    out_itemsize = jnp.dtype(out_dtype).itemsize
    bytes_accessed = (
        gn * M * K * x2d.dtype.itemsize
        + gm * K * N * w_t.dtype.itemsize
        + (gm * gn * N * bias_row.dtype.itemsize if has_bias else 0)
        + M * N * out_itemsize
    )

    # Buffered footprint; generous factor but kept below v7x's 64 MiB physical
    # VMEM (and a non-issue for v5e/v6e at these tile caps).
    vmem_est = (
        nbuf * tm * tk * x2d.dtype.itemsize
        + nbuf * tk * tn * w_t.dtype.itemsize
        + 2 * tm * tn * out_itemsize
        + (2 * tn * 4 if has_bias else 0)
        + (tm * tn * 4 if not out_is_f32 else 0)
    )
    vmem_limit = int(min(max(2 * vmem_est, 24 << 20), 56 << 20))

    return pl.pallas_call(
        kernel,
        out_shape=jax.ShapeDtypeStruct((M, N), out_dtype),
        grid_spec=pltpu.PrefetchScalarGridSpec(
            num_scalar_prefetch=0,
            grid=(gm, gn, gk),
            in_specs=in_specs,
            out_specs=pl.BlockSpec((tm, tn), lambda i, j, k: (i, j)),
            scratch_shapes=scratch_shapes,
        ),
        compiler_params=pltpu.CompilerParams(
            dimension_semantics=("parallel", "parallel", "arbitrary"),
            vmem_limit_bytes=vmem_limit,
        ),
        cost_estimate=pl.CostEstimate(
            flops=2 * M * N * K,
            transcendentals=0,
            bytes_accessed=bytes_accessed,
        ),
    )(*args)


# ----------------------------- Module wrapper ------------------------------ #

def pack_dense(params, in_features, out_features, block_in, block_out):
    """Pack per-block params (num_blocks, block_out, block_in) -> dense
    (out_features, in_features), blocks row-major over (rows, cols)."""
    num_block_rows = out_features // block_out
    num_block_cols = in_features // block_in
    w = params.reshape(num_block_rows, num_block_cols, block_out, block_in)
    w = jnp.transpose(w, (0, 2, 1, 3))  # (rows, block_out, cols, block_in)
    return w.reshape(out_features, in_features)


class HyperLinearPallas:
    def __init__(self, in_features, out_features, context_size, block_in,
                 block_out, frozen_context=False, bias=True, key=None,
                 weight_dtype=jnp.bfloat16):
        assert in_features % block_in == 0 and out_features % block_out == 0
        self.in_features = in_features
        self.out_features = out_features
        self.block_in = block_in
        self.block_out = block_out
        self.num_block_rows = out_features // block_out
        self.num_block_cols = in_features // block_in
        self.num_blocks = self.num_block_rows * self.num_block_cols

        # reset_parameters(): context = sqrt(2)/sqrt(in_features), bias = 0
        initial_context = math.sqrt(2) / math.sqrt(in_features)
        self.context = jnp.full(
            (self.num_blocks, context_size, 1), initial_context, jnp.float32
        )  # hypernetwork side; not used in forward (kept for shape fidelity)
        self.has_bias = bias
        self.bias = jnp.zeros((out_features,), jnp.float32) if bias else None

        # set_weight(params): deterministic synthetic per-block params.
        if key is None:
            key = jax.random.PRNGKey(0)
        params = jax.random.normal(
            key, (self.num_blocks, block_out, block_in), jnp.float32
        ) * (1.0 / math.sqrt(in_features))
        # Dense (out_features, in_features) f32 weight, kept for reference.
        self.weight = pack_dense(
            params, in_features, out_features, block_in, block_out
        )

        # --- one-time layout work (kept OUT of the jitted forward) --------- #
        # Pre-transpose to (K, N), zero-pad K and N to 128-multiples, and store
        # the streamed weight in bf16 (dominant HBM stream, native MXU dtype).
        self.k_pad = _round_up(in_features, 128)
        self.n_pad = _round_up(out_features, 128)
        w_t = self.weight.T.astype(jnp.float32)  # (K, N)
        w_t = jnp.pad(
            w_t,
            ((0, self.k_pad - in_features), (0, self.n_pad - out_features)),
        )
        self.w_t = w_t.astype(weight_dtype)
        if bias:
            # Bias stays f32: it feeds the f32 accumulator directly.
            self.bias_row = jnp.pad(
                self.bias.reshape(1, out_features),
                ((0, 0), (0, self.n_pad - out_features)),
            )
        else:
            self.bias_row = None

        self._num_tc = _num_tensorcores()

    def _choose_m_tiling(self, M, x_itemsize):
        # Small / moderate M: a single M block.  16-row multiple below 128
        # (packed-dtype safe), 128-multiple above (e.g. M=384 -> tm=384, no
        # 33% padding like a hard 256 cap would give).
        if M <= 512:
            tm = _round_up(M, 16) if M < 128 else _round_up(M, 128)
            return tm, tm
        # Large M: weight traffic scales with gm = m_pad/tm; padded rows add
        # x + output traffic.  Pick the candidate minimizing the total.
        w_bytes = self.k_pad * self.n_pad * jnp.dtype(self.w_t.dtype).itemsize
        best = None
        for tm in (512, 384, 256, 128):
            m_pad = _round_up(M, tm)
            traffic = ((m_pad // tm) * w_bytes
                       + m_pad * self.k_pad * x_itemsize
                       + m_pad * self.n_pad * 4)
            if best is None or traffic < best[0]:
                best = (traffic, tm, m_pad)
        return best[1], best[2]

    @partial(jax.jit, static_argnums=0)
    def __call__(self, x):
        # F.linear: applies to the last dim, arbitrary leading dims.
        lead = x.shape[:-1]
        M = math.prod(lead) if lead else 1
        x2d = x.reshape(M, self.in_features)

        tm, m_pad = self._choose_m_tiling(M, x.dtype.itemsize)
        pad_m = m_pad - M
        pad_k = self.k_pad - self.in_features
        if pad_m or pad_k:
            # Single fused pad of both axes (zero K-pad rows of W^T mean the
            # padded region contributes nothing to the reduction).
            x2d = jnp.pad(x2d, ((0, pad_m), (0, pad_k)))

        tk = _pick_tile(self.k_pad, 512)
        tn = _pick_tile(self.n_pad, 512)
        # v7x megacore only: if there is a single parallel block, split N so
        # both TensorCores get work (pure overhead on v5e/v6e -> skipped).
        if (self._num_tc >= 2
                and (m_pad // tm) * (self.n_pad // tn) == 1
                and self.n_pad >= 256):
            tn = _pick_tile(self.n_pad, self.n_pad // 2)

        out2d = _linear_pallas(
            x2d, self.w_t, self.bias_row if self.has_bias else None,
            tm=tm, tn=tn, tk=tk, out_dtype=x.dtype,
        )
        out2d = out2d[:M, : self.out_features]
        return out2d.reshape(*lead, self.out_features)


# ---------------------------------- main ----------------------------------- #

if __name__ == "__main__":
    key = jax.random.PRNGKey(0)
    k_x, k_w = jax.random.split(key)

    batch, seq = 2, 8
    in_features, out_features = 32, 16
    context_size, block_in, block_out = 8, 8, 8

    layer = HyperLinearPallas(
        in_features, out_features, context_size, block_in, block_out,
        bias=True, key=k_w,
    )

    x = jax.random.normal(k_x, (batch, seq, in_features), jnp.float32)

    y = jax.block_until_ready(layer(x))
    assert y.shape == (batch, seq, out_features)

    # Reference emulating the kernel numerics (bf16 operands, f32 accumulate).
    xb = x.astype(jnp.bfloat16).astype(jnp.float32)
    wb = layer.weight.astype(jnp.bfloat16).astype(jnp.float32)
    y_ref = jnp.einsum("bsk,nk->bsn", xb, wb) + layer.bias
    assert jnp.allclose(y, y_ref, atol=1e-4, rtol=1e-4)

    # Loose sanity check against the pure-f32 F.linear reference.
    y_f32 = jnp.einsum("bsk,nk->bsn", x, layer.weight) + layer.bias
    assert jnp.allclose(y, y_f32, atol=5e-2, rtol=5e-2)

    print("KERNEL_OK")
</pallas_src>

<mosaic_0001>
module attributes {stable_mosaic.version = 11 : i64} {
  func.func @_hl_kernel(%arg0: i32, %arg1: i32, %arg2: i32, %arg3: memref<16x128xf32, #tpu.memory_space<vmem>>, %arg4: memref<128x128xbf16, #tpu.memory_space<vmem>>, %arg5: memref<1x128xf32, #tpu.memory_space<vmem>>, %arg6: memref<16x128xf32, #tpu.memory_space<vmem>>) attributes {dimension_semantics = [#tpu.dimension_semantics<parallel>, #tpu.dimension_semantics<parallel>, #tpu.dimension_semantics<arbitrary>], iteration_bounds = array<i64: 1, 1, 1>, scalar_prefetch = 0 : i64, scratch_operands = 0 : i64, tpu.core_type = #tpu.core_type<tc>, window_params = [{transform_indices = @transform_0, window_bounds = array<i64: 16, 128>}, {transform_indices = @transform_1, window_bounds = array<i64: 128, 128>}, {transform_indices = @transform_2, window_bounds = array<i64: 1, 128>}, {transform_indices = @transform_3, window_bounds = array<i64: 16, 128>}]} {
    %c0_i32 = arith.constant 0 : i32
    %0 = arith.cmpi eq, %arg2, %c0_i32 : i32
    %1 = arith.extui %0 : i1 to i32
    %c0_i32_0 = arith.constant 0 : i32
    %2 = arith.cmpi ne, %1, %c0_i32_0 : i32
    scf.if %2 {
      %c0_8 = arith.constant 0 : index
      %c0_9 = arith.constant 0 : index
      %10 = vector.load %arg5[%c0_8, %c0_9] : memref<1x128xf32, #tpu.memory_space<vmem>>, vector<1x128xf32>
      %11 = vector.shape_cast %10 : vector<1x128xf32> to vector<1x128xf32>
      %12 = vector.broadcast %11 : vector<1x128xf32> to vector<16x128xf32>
      %c0_10 = arith.constant 0 : index
      %c0_11 = arith.constant 0 : index
      %13 = vector.load %arg6[%c0_10, %c0_11] : memref<16x128xf32, #tpu.memory_space<vmem>>, vector<16x128xf32>
      tpu.vector_store %arg6[%c0_10, %c0_11], %12 {strides = array<i32>} : memref<16x128xf32, #tpu.memory_space<vmem>>, vector<16x128xf32>,
    } else {
    }
    %c0 = arith.constant 0 : index
    %c0_1 = arith.constant 0 : index
    %3 = vector.load %arg3[%c0, %c0_1] : memref<16x128xf32, #tpu.memory_space<vmem>>, vector<16x128xf32>
    %4 = arith.truncf %3 : vector<16x128xf32> to vector<16x128xbf16>
    %c0_2 = arith.constant 0 : index
    %c0_3 = arith.constant 0 : index
    %5 = vector.load %arg6[%c0_2, %c0_3] : memref<16x128xf32, #tpu.memory_space<vmem>>, vector<16x128xf32>
    %c0_4 = arith.constant 0 : index
    %c0_5 = arith.constant 0 : index
    %6 = vector.load %arg4[%c0_4, %c0_5] : memref<128x128xbf16, #tpu.memory_space<vmem>>, vector<128x128xbf16>
    %cst = arith.constant dense<0.000000e+00> : vector<16x128xf32>
    %7 = tpu.matmul %4, %6, %cst {dimension_numbers = #tpu.dot_dimension_numbers<[1], [0], [0], [1], [0, 0, 1, 1], [], []>} : vector<16x128xbf16>, vector<128x128xbf16>, vector<16x128xf32> -> vector<16x128xf32>
    %8 = arith.addf %5, %7 : vector<16x128xf32>
    %c0_6 = arith.constant 0 : index
    %c0_7 = arith.constant 0 : index
    %9 = vector.load %arg6[%c0_6, %c0_7] : memref<16x128xf32, #tpu.memory_space<vmem>>, vector<16x128xf32>
    tpu.vector_store %arg6[%c0_6, %c0_7], %8 {strides = array<i32>} : memref<16x128xf32, #tpu.memory_space<vmem>>, vector<16x128xf32>,
    return
  }
  func.func @transform_0(%arg0: i32, %arg1: i32, %arg2: i32) -> (i32, i32) {
    %c0_i32 = arith.constant 0 : i32
    return %arg0, %arg2 : i32, i32
  }
  func.func @transform_1(%arg0: i32, %arg1: i32, %arg2: i32) -> (i32, i32) {
    %c0_i32 = arith.constant 0 : i32
    return %arg2, %arg1 : i32, i32
  }
  func.func @transform_2(%arg0: i32, %arg1: i32, %arg2: i32) -> (i32, i32) {
    %c0_i32 = arith.constant 0 : i32
    %c0_i32_0 = arith.constant 0 : i32
    return %c0_i32, %arg1 : i32, i32
  }
  func.func @transform_3(%arg0: i32, %arg1: i32, %arg2: i32) -> (i32, i32) {
    %c0_i32 = arith.constant 0 : i32
    return %arg0, %arg1 : i32, i32
  }
}

</mosaic_0001>

<llo_original>
// kernel: a_call__.1
$region0: #{a_call__.1}
  #allocation0 [shape = 'u32[]', space=smem, size = 0x4, offset = 0x4, fixed_abs, tag = 'smem constant byte address 0x4 - core index']
  #allocation1 [shape = 'u32[144,128]{1,0:T(1,128)}', space=vmem, size = 0x12000, scoped, tag = 'internal scratch']
  %s0 = inlined_call_operand.vmem [shape: f32[16,128], index: 0, kind: input, shape index: {}]
  %s1 = inlined_call_operand.hbm [shape: bf16[128,128], index: 1, kind: input, shape index: {}]
  %s2 = inlined_call_operand.vmem [shape: f32[1,128], index: 2, kind: input, shape index: {}]
  %s3 = inlined_call_operand.vmem [shape: f32[16,128], index: 3, kind: output, shape index: {}]
  %s4 = sld [smem:[#allocation0]]
  $region30: #{a_call__.1} parent=0
    _
  %s6 = ssub.s32 1, %s4
  %s7 = scalar_select 0, %s6, %s4
  $region1: #{a_call__.1} parent=0
    #allocation2 [shape = 'u8[32768]{0}', space=vmem, size = 0x8000, scoped, tag = 'input window, operand 1, single buffered']
    #allocation3 [shape = 's32[1]{0}', space=sflag, size = 0x4, scoped, tag = 'scoped memory for a_call__.1']
    %8 = vsyncpa [#allocation3], 0
    // Predicated region
    $region2: #{a_call__.1} parent=1 // pred_check
      _
    $region3: #{a_call__.1} parent=1 // pred_check_branch
      %10 = sbr.rel (0) target = $region5
    $region4: #{a_call__.1} parent=1 // pred_region
      _
    $region5: #{a_call__.1} parent=1 // pred_fallthru
      _
    // Predicated region
    $region6: #{a_call__.1} parent=1 // pred_check
      _
    $region7: #{a_call__.1} parent=1 // pred_check_branch
      %12 = sbr.rel (0) target = $region9
    $region8: #{a_call__.1} parent=1 // pred_region
      %s14 = ssub.s32 1024, 1024
      %15 = vsyncadd [#allocation3], %s14
      %s16 = sshll.u32 [#allocation2], 4
      %s17 = int_to_ptr.vmem [resolvable:$true] %s16
      %22 = dma.hbm_to_vmem [thread:$0]  %s1, 1024, %s17, [#allocation3], 64, 64, 4
    $region9: #{a_call__.1} parent=1 // pred_fallthru
      _
    // Predicated region
    $region10: #{a_call__.1} parent=1 // pred_check
      _
    $region11: #{a_call__.1} parent=1 // pred_check_branch
      %24 = sbr.rel (0) target = $region13
    $region12: #{a_call__.1} parent=1 // pred_region
      _
    $region13: #{a_call__.1} parent=1 // pred_fallthru
      _
    // Predicated region
    $region14: #{a_call__.1} parent=1 // pred_check
      _
    $region15: #{a_call__.1} parent=1 // pred_check_branch
      %26 = sbr.rel (0) target = $region17
    $region16: #{a_call__.1} parent=1 // pred_region
      %27 = dma.done [#allocation3], 1024
    $region17: #{a_call__.1} parent=1 // pred_fallthru
      _
    %p29 = scmp.eq.s32.totalorder 0, 0
    // Predicated region
    $region18: #{a_call__.1} parent=1 // pred_check
      %p30 = pneg %p29
    $region19: #{a_call__.1} parent=1 // pred_check_branch
      %32 = sbr.rel (%p30) target = $region21
    $region20: #{a_call__.1} parent=1 // pred_region
      %v33 = vld [vmem:[%s2] sm:$0x1]
      %v35 = vlaneseq
      %v36 = vshrl.u32 %v35, 7
      %v37 = vsub.s32 0, %v36
      %v38 = vrot.slane %v33, %v37
      %40 = vst [vmem:[%s3] sm:$0xff] %v38
      %41 = vst [vmem:[%s3 + $0x8] sm:$0xff] %v38
    $region21: #{a_call__.1} parent=1 // pred_fallthru
      _
    %v42 = vld [vmem:[%s0] sm:$0xff]
    %v43 = vld [vmem:[%s0 + $0x8] sm:$0xff]
    %v44 = vpack.c.bf16 %v43, %v42
    %v45 = vld [vmem:[%s3] sm:$0xff]
    %v46 = vld [vmem:[%s3 + $0x8] sm:$0xff]
    %v47 = vld [vmem:[#allocation2] sm:$0xf]
    %v48 = vld [vmem:[#allocation2 + $0x4] sm:$0xf]
    %v49 = vld [vmem:[#allocation2 + $0x8] sm:$0xf]
    %v50 = vld [vmem:[#allocation2 + $0xc] sm:$0xf]
    %v51 = vld [vmem:[#allocation2 + $0x10] sm:$0xf]
    %v52 = vld [vmem:[#allocation2 + $0x14] sm:$0xf]
    %v53 = vld [vmem:[#allocation2 + $0x18] sm:$0xf]
    %v54 = vld [vmem:[#allocation2 + $0x1c] sm:$0xf]
    %v55 = vld [vmem:[#allocation2 + $0x20] sm:$0xf]
    %v56 = vld [vmem:[#allocation2 + $0x24] sm:$0xf]
    %v57 = vld [vmem:[#allocation2 + $0x28] sm:$0xf]
    %v58 = vld [vmem:[#allocation2 + $0x2c] sm:$0xf]
    %v59 = vld [vmem:[#allocation2 + $0x30] sm:$0xf]
    %v60 = vld [vmem:[#allocation2 + $0x34] sm:$0xf]
    %v61 = vld [vmem:[#allocation2 + $0x38] sm:$0xf]
    %v62 = vld [vmem:[#allocation2 + $0x3c] sm:$0xf]
    %v79 = vunpack.c.l.b16 %v47
    %v80 = vunpack.c.l.b16 %v48
    %v81 = vunpack.c.l.b16 %v49
    %v82 = vunpack.c.l.b16 %v50
    %v83 = vunpack.c.l.b16 %v51
    %v84 = vunpack.c.l.b16 %v52
    %v85 = vunpack.c.l.b16 %v53
    %v86 = vunpack.c.l.b16 %v54
    %v87 = vunpack.c.l.b16 %v55
    %v88 = vunpack.c.l.b16 %v56
    %v89 = vunpack.c.l.b16 %v57
    %v90 = vunpack.c.l.b16 %v58
    %v91 = vunpack.c.l.b16 %v59
    %v92 = vunpack.c.l.b16 %v60
    %v93 = vunpack.c.l.b16 %v61
    %v94 = vunpack.c.l.b16 %v62
    %v95 = vpack.c.b16 %v80, %v79
    %v96 = vpack.c.b16 %v82, %v81
    %v97 = vpack.c.b16 %v84, %v83
    %v98 = vpack.c.b16 %v86, %v85
    %v99 = vpack.c.b16 %v88, %v87
    %v100 = vpack.c.b16 %v90, %v89
    %v101 = vpack.c.b16 %v92, %v91
    %v102 = vpack.c.b16 %v94, %v93
    %111 = vmatprep.subr.bf16.mxu0 0
    %112 = vmatpush1.bf16.msra.mxu0 %v102
    %113 = vmatprep.subr.bf16.mxu0 0
    %114 = vmatpush1.bf16.msra.mxu0 %v101
    %115 = vmatprep.subr.bf16.mxu0 0
    %116 = vmatpush1.bf16.msra.mxu0 %v100
    %117 = vmatprep.subr.bf16.mxu0 0
    %118 = vmatpush1.bf16.msra.mxu0 %v99
    %119 = vmatprep.subr.bf16.mxu0 0
    %120 = vmatpush1.bf16.msra.mxu0 %v98
    %121 = vmatprep.subr.bf16.mxu0 0
    %122 = vmatpush1.bf16.msra.mxu0 %v97
    %123 = vmatprep.subr.bf16.mxu0 0
    %124 = vmatpush1.bf16.msra.mxu0 %v96
    %125 = vmatprep.subr.bf16.mxu0 0
    %126 = vmatpush1.bf16.msra.mxu0 %v95
    %127 = vmatprep.subr.bf16.mxu0 0
    %128 = vmatpush2.bf16.msra.mxu0 0
    %129 = vmatprep.subr.bf16.mxu0 0
    %130 = vmatpush2.bf16.msra.mxu0 0
    %131 = vmatprep.subr.bf16.mxu0 0
    %132 = vmatpush2.bf16.msra.mxu0 0
    %133 = vmatprep.subr.bf16.mxu0 0
    %134 = vmatpush2.bf16.msra.mxu0 0
    %135 = vmatprep.subr.bf16.mxu0 0
    %136 = vmatpush2.bf16.msra.mxu0 0
    %137 = vmatprep.subr.bf16.mxu0 0
    %138 = vmatpush2.bf16.msra.mxu0 0
    %139 = vmatprep.subr.bf16.mxu0 0
    %140 = vmatpush2.bf16.msra.mxu0 0
    %141 = vmatprep.subr.bf16.mxu0 0
    %142 = vmatpush2.bf16.msra.mxu0 0
    %143 = vmatprep.mubr.bf16.mxu0 0
    %144 = vmatmul.mubr.bf16.gmra.mxu0 %v44
    %v145 = vpop.f32.mrf.mxu0
    %v146 = vadd.f32 0.0, %v145
    %v147 = vpop.f32.mrf.mxu0
    %v148 = vpop.f32.mrf.mxu0
    %v149 = vadd.f32 0.0, %v148
    %v150 = vpop.f32.mrf.mxu0
    %151 = vdwg.mxu0
    %v152 = vadd.f32 %v45, %v146
    %v153 = vadd.f32 %v46, %v149
    %154 = vst [vmem:[%s3] sm:$0xff] %v152
    %155 = vst [vmem:[%s3 + $0x8] sm:$0xff] %v153
    // Predicated region
    $region22: #{a_call__.1} parent=1 // pred_check
      _
    $region23: #{a_call__.1} parent=1 // pred_check_branch
      %157 = sbr.rel (0) target = $region25
    $region24: #{a_call__.1} parent=1 // pred_region
      _
    $region25: #{a_call__.1} parent=1 // pred_fallthru
      _
    // Predicated region
    $region26: #{a_call__.1} parent=1 // pred_check
      _
    $region27: #{a_call__.1} parent=1 // pred_check_branch
      %159 = sbr.rel (0) target = $region29
    $region28: #{a_call__.1} parent=1 // pred_region
      _
    $region29: #{a_call__.1} parent=1 // pred_fallthru
      _
    %160 = vsyncpa [#allocation3], 1

</llo_original>
